<compile_context>
chip_gen: v6e
topology: v6e:2x2x1
jax: 0.10.0
libtpu: 0.0.40
codegen_flags: <defaults>
</compile_context>

<pallas_src>
import functools

import jax
import jax.numpy as jnp
from jax import lax
from jax.experimental import pallas as pl
from jax.experimental.pallas import tpu as pltpu


def _round_up(x, m):
    return (x + m - 1) // m * m


def _rpq_kernel(x_ref, w_ref, idx_ref, *, heads, codes):
    # x_ref  : (TB, D)     streamed token tile
    # w_ref  : (D, H*C)    fused (projection @ normalized-codebook^T), resident
    # idx_ref: (TB, H)     output code indices for this tile (final layout)
    x = x_ref[...]
    w = w_ref[...]
    # Single MXU matmul with full lane utilization: (TB, D) @ (D, H*C).
    sim = jnp.dot(x, w, preferred_element_type=jnp.float32)      # (TB, H*C)

    tb = x.shape[0]
    head_iota = lax.broadcasted_iota(jnp.int32, (tb, heads), 1)  # (TB, H)
    result = jnp.zeros((tb, heads), jnp.int32)
    for h in range(heads):                                       # static, small
        s = sim[:, h * codes:(h + 1) * codes]                    # (TB, C)
        code_iota = lax.broadcasted_iota(jnp.int32, s.shape, 1)
        mx = jnp.max(s, axis=-1, keepdims=True)
        # First-occurrence argmax (matches torch.argmax). Fill with C-1 so the
        # result stays in-range even for a degenerate (all-equal / NaN) row.
        idx = jnp.min(jnp.where(s == mx, code_iota, codes - 1),
                      axis=-1, keepdims=True)                    # (TB, 1)
        result = jnp.where(head_iota == h, idx, result)
    idx_ref[...] = result


@functools.partial(jax.jit, static_argnames=("block_tokens",))
def random_projection_quantize(x, rand_projs, codebook, *, block_tokens=512):
    """x: (B, N, D), rand_projs: (H, D, E), codebook: (H, C, E) -> (B, N, H) int32.

    Note: returns int32 indices (torch returns int64).
    """
    b, n, d = x.shape
    h, _, e = rand_projs.shape
    c = codebook.shape[1]
    bn = b * n

    # ---- host-side (XLA) precompute: tiny fused weight (H, D, C) ------------
    cb32 = codebook.astype(jnp.float32)
    cb_n = cb32 / jnp.maximum(
        jnp.linalg.norm(cb32, axis=-1, keepdims=True), 1e-12)
    w_fused = jnp.einsum('hde,hce->hdc', rand_projs.astype(jnp.float32), cb_n,
                         precision=lax.Precision.HIGHEST)          # (H, D, C)
    w_big = jnp.transpose(w_fused, (1, 0, 2)).reshape(d, h * c)    # (D, H*C)
    # TODO(synk): for memory-bound production shapes, feed x / w_big as bf16
    # (keep preferred_element_type=f32) to halve the HBM stream; and tile the
    # H*C axis if D*H*C grows past the VMEM budget (esp. v7x's 64 MiB).

    # ---- token tiling --------------------------------------------------------
    tb = min(block_tokens, _round_up(bn, 8))
    tb = _round_up(tb, 8)
    bn_pad = _round_up(bn, tb)
    xf = x.reshape(bn, d).astype(jnp.float32)
    if bn_pad != bn:
        xf = jnp.pad(xf, ((0, bn_pad - bn), (0, 0)))

    kernel = functools.partial(_rpq_kernel, heads=h, codes=c)
    out = pl.pallas_call(
        kernel,
        out_shape=jax.ShapeDtypeStruct((bn_pad, h), jnp.int32),
        grid=(bn_pad // tb,),
        in_specs=[
            pl.BlockSpec((tb, d), lambda t: (t, 0)),        # streamed token tile
            pl.BlockSpec((d, h * c), lambda t: (0, 0)),     # resident fused weight
        ],
        out_specs=pl.BlockSpec((tb, h), lambda t: (t, 0)),  # final (BN, H) layout
        compiler_params=pltpu.CompilerParams(
            dimension_semantics=("parallel",)),             # 2 TCs on v7x
    )(xf, w_big)

    return out[:bn].reshape(b, n, h)


def _reference(x, rand_projs, codebook):
    proj = jnp.einsum('bnd,hde->bnhe', x, rand_projs,
                      precision=lax.Precision.HIGHEST)
    proj_n = proj / jnp.maximum(
        jnp.linalg.norm(proj, axis=-1, keepdims=True), 1e-12)
    cb_n = codebook / jnp.maximum(
        jnp.linalg.norm(codebook, axis=-1, keepdims=True), 1e-12)
    sim = jnp.einsum('bnhe,hce->bnhc', proj_n, cb_n,
                     precision=lax.Precision.HIGHEST)
    return jnp.argmax(sim, axis=-1).astype(jnp.int32)


if __name__ == "__main__":
    # module hyper-params (small, consistent with the module's __init__)
    dim = 32            # input feature dim d
    codebook_dim = 16   # e
    num_codebooks = 2   # h (== heads)
    codebook_size = 64  # c
    b, n = 2, 9         # bn=18 -> exercises multi-tile grid + padding below

    key = jax.random.PRNGKey(0)
    kx, kp, kc = jax.random.split(key, 3)

    x = jax.random.normal(kx, (b, n, dim), dtype=jnp.float32)

    # deterministic "xavier normal" init for rand_projs (h, dim, codebook_dim)
    fan_in, fan_out = dim * codebook_dim, num_codebooks * codebook_dim
    xav_std = (2.0 / (fan_in + fan_out)) ** 0.5
    rand_projs = xav_std * jax.random.normal(
        kp, (num_codebooks, dim, codebook_dim), dtype=jnp.float32)

    # deterministic codebook init (CosineSimCodebook l2-normalizes anyway)
    codebook = jax.random.normal(
        kc, (num_codebooks, codebook_size, codebook_dim), dtype=jnp.float32)

    # small block_tokens so the toy shape exercises the tiled/padded path;
    # production default is 512 rows per tile.
    indices = random_projection_quantize(x, rand_projs, codebook, block_tokens=8)
    indices = jax.block_until_ready(indices)

    ref = _reference(x, rand_projs, codebook)
    assert indices.shape == (b, n, num_codebooks), indices.shape
    assert indices.dtype == jnp.int32
    assert bool(jnp.all(indices == ref)), "mismatch vs pure-JAX reference"

    print("KERNEL_OK")
</pallas_src>

<mosaic_0001>
module attributes {stable_mosaic.version = 11 : i64} {
  func.func @_rpq_kernel(%arg0: i32, %arg1: memref<8x32xf32, #tpu.memory_space<vmem>>, %arg2: memref<32x128xf32, #tpu.memory_space<vmem>>, %arg3: memref<8x2xi32, #tpu.memory_space<vmem>>) attributes {dimension_semantics = [#tpu.dimension_semantics<parallel>], iteration_bounds = array<i64: 3>, scalar_prefetch = 0 : i64, scratch_operands = 0 : i64, tpu.core_type = #tpu.core_type<tc>, window_params = [{transform_indices = @transform_0, window_bounds = array<i64: 8, 32>}, {pipeline_mode = #tpu.pipeline_mode<synchronous>, transform_indices = @transform_1, window_bounds = array<i64: 32, 128>}, {transform_indices = @transform_2, window_bounds = array<i64: 8, 2>}]} {
    %c0 = arith.constant 0 : index
    %c0_0 = arith.constant 0 : index
    %0 = vector.load %arg1[%c0, %c0_0] : memref<8x32xf32, #tpu.memory_space<vmem>>, vector<8x32xf32>
    %c0_1 = arith.constant 0 : index
    %c0_2 = arith.constant 0 : index
    %1 = vector.load %arg2[%c0_1, %c0_2] : memref<32x128xf32, #tpu.memory_space<vmem>>, vector<32x128xf32>
    %cst = arith.constant dense<0.000000e+00> : vector<8x128xf32>
    %2 = tpu.matmul %0, %1, %cst {dimension_numbers = #tpu.dot_dimension_numbers<[1], [0], [0], [1], [0, 0, 1, 1], [], []>} : vector<8x32xf32>, vector<32x128xf32>, vector<8x128xf32> -> vector<8x128xf32>
    %3 = tpu.iota {dimensions = array<i32: 1>} : vector<8x2xi32>
    %c0_i32 = arith.constant 0 : i32
    %4 = vector.broadcast %c0_i32 : i32 to vector<8x2xi32>
    %5 = vector.extract_strided_slice %2 {offsets = [0, 0], sizes = [8, 64], strides = [1, 1]} : vector<8x128xf32> to vector<8x64xf32>
    %6 = tpu.iota {dimensions = array<i32: 1>} : vector<8x64xi32>
    %cst_3 = arith.constant dense<0xFF800000> : vector<8xf32>
    %7 = vector.multi_reduction <maximumf>, %5, %cst_3 [1] : vector<8x64xf32> to vector<8xf32>
    %8 = vector.shape_cast %7 : vector<8xf32> to vector<8x1xf32>
    %9 = vector.broadcast %8 : vector<8x1xf32> to vector<8x64xf32>
    %10 = arith.cmpf oeq, %5, %9 : vector<8x64xf32>
    %c63_i32 = arith.constant 63 : i32
    %11 = vector.broadcast %c63_i32 : i32 to vector<8x64xi32>
    %12 = arith.select %10, %6, %11 : vector<8x64xi1>, vector<8x64xi32>
    %cst_4 = arith.constant dense<2147483647> : vector<8xi32>
    %13 = vector.multi_reduction <minsi>, %12, %cst_4 [1] : vector<8x64xi32> to vector<8xi32>
    %14 = vector.shape_cast %13 : vector<8xi32> to vector<8x1xi32>
    %c0_i32_5 = arith.constant 0 : i32
    %15 = vector.broadcast %c0_i32_5 : i32 to vector<8x2xi32>
    %16 = arith.cmpi eq, %3, %15 : vector<8x2xi32>
    %17 = vector.shape_cast %14 : vector<8x1xi32> to vector<8x1xi32>
    %18 = vector.broadcast %17 : vector<8x1xi32> to vector<8x2xi32>
    %19 = arith.select %16, %18, %4 : vector<8x2xi1>, vector<8x2xi32>
    %20 = vector.extract_strided_slice %2 {offsets = [0, 64], sizes = [8, 64], strides = [1, 1]} : vector<8x128xf32> to vector<8x64xf32>
    %21 = tpu.iota {dimensions = array<i32: 1>} : vector<8x64xi32>
    %cst_6 = arith.constant dense<0xFF800000> : vector<8xf32>
    %22 = vector.multi_reduction <maximumf>, %20, %cst_6 [1] : vector<8x64xf32> to vector<8xf32>
    %23 = vector.shape_cast %22 : vector<8xf32> to vector<8x1xf32>
    %24 = vector.broadcast %23 : vector<8x1xf32> to vector<8x64xf32>
    %25 = arith.cmpf oeq, %20, %24 : vector<8x64xf32>
    %c63_i32_7 = arith.constant 63 : i32
    %26 = vector.broadcast %c63_i32_7 : i32 to vector<8x64xi32>
    %27 = arith.select %25, %21, %26 : vector<8x64xi1>, vector<8x64xi32>
    %cst_8 = arith.constant dense<2147483647> : vector<8xi32>
    %28 = vector.multi_reduction <minsi>, %27, %cst_8 [1] : vector<8x64xi32> to vector<8xi32>
    %29 = vector.shape_cast %28 : vector<8xi32> to vector<8x1xi32>
    %c1_i32 = arith.constant 1 : i32
    %30 = vector.broadcast %c1_i32 : i32 to vector<8x2xi32>
    %31 = arith.cmpi eq, %3, %30 : vector<8x2xi32>
    %32 = vector.shape_cast %29 : vector<8x1xi32> to vector<8x1xi32>
    %33 = vector.broadcast %32 : vector<8x1xi32> to vector<8x2xi32>
    %34 = arith.select %31, %33, %19 : vector<8x2xi1>, vector<8x2xi32>
    %c0_9 = arith.constant 0 : index
    %c0_10 = arith.constant 0 : index
    %35 = vector.load %arg3[%c0_9, %c0_10] : memref<8x2xi32, #tpu.memory_space<vmem>>, vector<8x2xi32>
    tpu.vector_store %arg3[%c0_9, %c0_10], %34 {strides = array<i32>} : memref<8x2xi32, #tpu.memory_space<vmem>>, vector<8x2xi32>,
    return
  }
  func.func @transform_0(%arg0: i32) -> (i32, i32) {
    %c0_i32 = arith.constant 0 : i32
    %c0_i32_0 = arith.constant 0 : i32
    return %arg0, %c0_i32 : i32, i32
  }
  func.func @transform_1(%arg0: i32) -> (i32, i32) {
    %c0_i32 = arith.constant 0 : i32
    %c0_i32_0 = arith.constant 0 : i32
    %c0_i32_1 = arith.constant 0 : i32
    return %c0_i32, %c0_i32_0 : i32, i32
  }
  func.func @transform_2(%arg0: i32) -> (i32, i32) {
    %c0_i32 = arith.constant 0 : i32
    %c0_i32_0 = arith.constant 0 : i32
    return %arg0, %c0_i32 : i32, i32
  }
}

</mosaic_0001>

<llo_original>
// kernel: random_projection_quantize.1
$region0: #{random_projection_quantize.1}
  #allocation0 [shape = 'u32[]', space=smem, size = 0x4, offset = 0x4, fixed_abs, tag = 'smem constant byte address 0x4 - core index']
  #allocation1 [shape = 'u32[144,128]{1,0:T(1,128)}', space=vmem, size = 0x12000, scoped, tag = 'internal scratch']
  %s0 = inlined_call_operand.vmem [shape: f32[24,32], index: 0, kind: input, shape index: {}]
  %s1 = inlined_call_operand.vmem [shape: f32[32,128], index: 1, kind: input, shape index: {}]
  %s2 = inlined_call_operand.vmem [shape: s32[24,2], index: 2, kind: output, shape index: {}]
  %s3 = sld [smem:[#allocation0]]
  $region41: #{random_projection_quantize.1} parent=0
    _
  %s5 = ssub.s32 1, %s3
  %s6 = scalar_select 0, %s5, %s3
  loop: start=0, step=1, limit=5
  $region2: #{random_projection_quantize.1} parent=0 // loop_pre_header
    _
  $region3: #{random_projection_quantize.1} parent=0 // loop_header
    %s8 = sphi 0, %s12
    %p9 = scmp.ge.s32.totalorder %s8, 5
    %s18 = sphi 0, %s20
    %s21 = sphi 0, %s18
    %s22 = sphi 0, %s21
    %s38 = sphi 0, %s22
    %s42 = sphi 0, %s42
    %s44 = sphi 0, %s42
    %s45 = sphi 0, %s44
    %s59 = sphi 0, %s45
    %s65 = sphi 0, %s67
    %s68 = sphi 0, %s65
    %s69 = sphi 0, %s68
    %s85 = sphi 0, %s69
  $region4: #{random_projection_quantize.1} parent=0 // loop_header_branch
    %11 = sbr.rel (%p9) target = $region8
  $region5: #{random_projection_quantize.1} parent=0 // loop_body
    %s13 = ssub.s32 %s8, 1
    %s14 = ssub.s32 %s8, 2
    %s15 = sadd.s32 %s8, 1
    %s16 = ssub.s32 %s8, %s15
    %p17 = scmp.eq.s32.totalorder %s16, 0
    %s19 = sadd.s32 %s18, 1
    %s20 = scalar_select %p17, %s18, %s19
    %p23 = pneg %p17
    %p24 = scmp.eq.s32.totalorder %s8, 2
    %p25 = por %p23, %p24
    %p26 = scmp.ne.s32.totalorder %s18, %s21
    %p27 = scmp.eq.s32.totalorder %s8, 0
    %p28 = por %p26, %p27
    %p29 = scmp.ne.s32.totalorder %s18, %s21
    %p30 = scmp.eq.s32.totalorder %s13, 2
    %p31 = por %p29, %p30
    %p32 = scmp.ne.s32.totalorder %s21, %s22
    %p33 = scmp.eq.s32.totalorder %s13, 0
    %p34 = por %p32, %p33
    %p35 = scmp.ne.s32.totalorder %s21, %s22
    %p36 = scmp.eq.s32.totalorder %s14, 2
    %p37 = por %p35, %p36
    %p39 = scmp.ne.s32.totalorder %s22, %s38
    %p40 = scmp.eq.s32.totalorder %s14, 0
    %p41 = por %p39, %p40
    %s43 = sadd.s32 %s42, 1
    %p46 = scmp.eq.s32.totalorder %s8, 2
    %p47 = scmp.ne.s32.totalorder %s42, %s44
    %p48 = scmp.eq.s32.totalorder %s8, 0
    %p49 = por %p47, %p48
    %p50 = scmp.ne.s32.totalorder %s42, %s44
    %p51 = scmp.eq.s32.totalorder %s13, 2
    %p52 = por %p50, %p51
    %p53 = scmp.ne.s32.totalorder %s44, %s45
    %p54 = scmp.eq.s32.totalorder %s13, 0
    %p55 = por %p53, %p54
    %p56 = scmp.ne.s32.totalorder %s44, %s45
    %p57 = scmp.eq.s32.totalorder %s14, 2
    %p58 = por %p56, %p57
    %p60 = scmp.ne.s32.totalorder %s45, %s59
    %p61 = scmp.eq.s32.totalorder %s14, 0
    %p62 = por %p60, %p61
    %s63 = ssub.s32 %s8, %s15
    %p64 = scmp.eq.s32.totalorder %s63, 0
    %s66 = sadd.s32 %s65, 1
    %s67 = scalar_select %p64, %s65, %s66
    %p70 = pneg %p64
    %p71 = scmp.eq.s32.totalorder %s8, 2
    %p72 = por %p70, %p71
    %p73 = scmp.ne.s32.totalorder %s65, %s68
    %p74 = scmp.eq.s32.totalorder %s8, 0
    %p75 = por %p73, %p74
    %p76 = scmp.ne.s32.totalorder %s65, %s68
    %p77 = scmp.eq.s32.totalorder %s13, 2
    %p78 = por %p76, %p77
    %p79 = scmp.ne.s32.totalorder %s68, %s69
    %p80 = scmp.eq.s32.totalorder %s13, 0
    %p81 = por %p79, %p80
    %p82 = scmp.ne.s32.totalorder %s68, %s69
    %p83 = scmp.eq.s32.totalorder %s14, 2
    %p84 = por %p82, %p83
    %p86 = scmp.ne.s32.totalorder %s69, %s85
    %p87 = scmp.eq.s32.totalorder %s14, 0
    %p88 = por %p86, %p87
    %p89 = scmp.le.s32.totalorder 1, %s8
    %p90 = scmp.lt.s32.totalorder %s8, 4
    %p91 = pnand %p89, %p90
    %p92 = pneg %p91
    // Predicated region
    $region9: #{random_projection_quantize.1} parent=5 // pred_check
      _
    $region10: #{random_projection_quantize.1} parent=5 // pred_check_branch
      %94 = sbr.rel (%p91) target = $region12
    $region11: #{random_projection_quantize.1} parent=5 // pred_region
      %s95 = ssub.s32 %s8, 1
      // Predicated region
      $region13: #{random_projection_quantize.1} parent=11 // pred_check
        %p96 = pneg %p55
      $region14: #{random_projection_quantize.1} parent=11 // pred_check_branch
        %98 = sbr.rel (%p96) target = $region16
      $region15: #{random_projection_quantize.1} parent=11 // pred_region
        _
      $region16: #{random_projection_quantize.1} parent=11 // pred_fallthru
        _
    $region12: #{random_projection_quantize.1} parent=5 // pred_fallthru
      _
    %p99 = scmp.lt.s32.totalorder %s8, 3
    // Predicated region
    $region17: #{random_projection_quantize.1} parent=5 // pred_check
      %p100 = pneg %p99
    $region18: #{random_projection_quantize.1} parent=5 // pred_check_branch
      %102 = sbr.rel (%p100) target = $region20
    $region19: #{random_projection_quantize.1} parent=5 // pred_region
      // Predicated region
      $region21: #{random_projection_quantize.1} parent=19 // pred_check
        %p103 = pneg %p28
      $region22: #{random_projection_quantize.1} parent=19 // pred_check_branch
        %105 = sbr.rel (%p103) target = $region24
      $region23: #{random_projection_quantize.1} parent=19 // pred_region
        %p106 = scmp.lt.s32.totalorder %s8, 2
        %s107 = scalar_select %p106, %s8, 2
        %s108 = smul.addr %s107, 8
        %s109 = scalar_lea.vmem %s0, %s108
      $region24: #{random_projection_quantize.1} parent=19 // pred_fallthru
        _
    $region20: #{random_projection_quantize.1} parent=5 // pred_fallthru
      _
    %p110 = scmp.le.s32.totalorder 1, %s8
    %p111 = scmp.lt.s32.totalorder %s8, 4
    %p112 = pnand %p110, %p111
    %p113 = pneg %p112
    // Predicated region
    $region25: #{random_projection_quantize.1} parent=5 // pred_check
      _
    $region26: #{random_projection_quantize.1} parent=5 // pred_check_branch
      %115 = sbr.rel (%p112) target = $region28
    $region27: #{random_projection_quantize.1} parent=5 // pred_region
      %s116 = ssub.s32 %s8, 1
      %p117 = scmp.lt.s32.totalorder %s13, 2
      %s118 = scalar_select %p117, %s13, 2
      %s119 = smul.addr %s118, 8
      %s120 = scalar_lea.vmem %s0, %s119
      %p121 = pneg %p34
      %p122 = pneg %p31
      %p123 = pneg %p55
      %p124 = pneg %p52
      %p125 = pneg %p81
      %p126 = pneg %p78
      %p127 = scmp.lt.s32.totalorder %s13, 2
      %s128 = scalar_select %p127, %s13, 2
      %s129 = smul.addr %s128, 8
      %s130 = scalar_lea.vmem %s2, %s129
      %p131 = scmp.lt.s32.totalorder %s13, 2
      %s132 = scalar_select %p131, %s13, 2
      %s133 = smul.addr %s132, 8
      %s134 = scalar_lea.vmem %s0, %s133
      %p135 = scmp.lt.s32.totalorder %s13, 2
      %s136 = scalar_select %p135, %s13, 2
      %s137 = smul.addr %s136, 8
      %s138 = scalar_lea.vmem %s2, %s137
      %v139 = vld [vmem:[%s134] sm:$0xff]
      %v140 = vld [vmem:[%s1] sm:$0xff]
      %v141 = vld [vmem:[%s1 + $0x8] sm:$0xff]
      %v142 = vld [vmem:[%s1 + $0x10] sm:$0xff]
      %v143 = vld [vmem:[%s1 + $0x18] sm:$0xff]
      %vm144 = vcmask 261120
      %v146 = vsel %vm144, %v139, 0
      %148 = vmatprep.subr.mxu0 0.0
      %149 = vmatpush1.msra.mxu0 0.0
      %150 = vmatprep.subr.mxu0 0.0
      %151 = vmatpush1.msra.mxu0 0.0
      %152 = vmatprep.subr.mxu0 0.0
      %153 = vmatpush1.msra.mxu0 0.0
      %154 = vmatprep.subr.mxu0 0.0
      %155 = vmatpush1.msra.mxu0 0.0
      %156 = vmatprep.subr.mxu0 0.0
      %157 = vmatpush1.msra.mxu0 0.0
      %158 = vmatprep.subr.mxu0 0.0
      %159 = vmatpush1.msra.mxu0 0.0
      %160 = vmatprep.subr.mxu0 0.0
      %161 = vmatpush1.msra.mxu0 0.0
      %162 = vmatprep.subr.mxu0 0.0
      %163 = vmatpush1.msra.mxu0 0.0
      %164 = vmatprep.subr.mxu0 0.0
      %165 = vmatpush1.msra.mxu0 0.0
      %166 = vmatprep.subr.mxu0 0.0
      %167 = vmatpush1.msra.mxu0 0.0
      %168 = vmatprep.subr.mxu0 0.0
      %169 = vmatpush1.msra.mxu0 0.0
      %170 = vmatprep.subr.mxu0 0.0
      %171 = vmatpush1.msra.mxu0 0.0
      %172 = vmatprep.subr.mxu0 0.0
      %173 = vmatpush1.msra.mxu0 %v143
      %174 = vmatprep.subr.mxu0 0.0
      %175 = vmatpush1.msra.mxu0 %v142
      %176 = vmatprep.subr.mxu0 0.0
      %177 = vmatpush1.msra.mxu0 %v141
      %178 = vmatprep.subr.mxu0 0.0
      %179 = vmatpush1.msra.mxu0 %v140
      %180 = vmatprep.subr.mxu0 0.0
      %181 = vmatpush2.msra.mxu0 0.0
      %182 = vmatprep.subr.mxu0 0.0
      %183 = vmatpush2.msra.mxu0 0.0
      %184 = vmatprep.subr.mxu0 0.0
      %185 = vmatpush2.msra.mxu0 0.0
      %186 = vmatprep.subr.mxu0 0.0
      %187 = vmatpush2.msra.mxu0 0.0
      %188 = vmatprep.subr.mxu0 0.0
      %189 = vmatpush2.msra.mxu0 0.0
      %190 = vmatprep.subr.mxu0 0.0
      %191 = vmatpush2.msra.mxu0 0.0
      %192 = vmatprep.subr.mxu0 0.0
      %193 = vmatpush2.msra.mxu0 0.0
      %194 = vmatprep.subr.mxu0 0.0
      %195 = vmatpush2.msra.mxu0 0.0
      %196 = vmatprep.subr.mxu0 0.0
      %197 = vmatpush2.msra.mxu0 0.0
      %198 = vmatprep.subr.mxu0 0.0
      %199 = vmatpush2.msra.mxu0 0.0
      %200 = vmatprep.subr.mxu0 0.0
      %201 = vmatpush2.msra.mxu0 0.0
      %202 = vmatprep.subr.mxu0 0.0
      %203 = vmatpush2.msra.mxu0 0.0
      %204 = vmatprep.subr.mxu0 0.0
      %205 = vmatpush2.msra.mxu0 0.0
      %206 = vmatprep.subr.mxu0 0.0
      %207 = vmatpush2.msra.mxu0 0.0
      %208 = vmatprep.subr.mxu0 0.0
      %209 = vmatpush2.msra.mxu0 0.0
      %210 = vmatprep.subr.mxu0 0.0
      %211 = vmatpush2.msra.mxu0 0.0
      %212 = vmatprep.mubr.f32.mxu0 0.0
      %213 = vmatmul.mubr.f32.gmra.mxu0 %v146
      %v214 = vpop.f32.mrf.mxu0
      %v215 = vadd.f32 0.0, %v214
      %v216 = vpop.f32.mrf.mxu0
      %217 = vdwg.mxu0
      %v218 = vlaneseq
      %v219 = vand.u32 %v218, 127
      %vm220 = vcmask 523264
      %v221 = vsel %vm220, %v215, -inf
      %222 = vmax.xlane.f32.xlu0 %v221
      %v223 = vpop.xlane.xlu0 %222
      %vm224 = vcmp.eq.f32.partialorder %v215, %v223
      %v225 = vsel %vm224, %v219, 63
      %v226 = vsel %vm220, %v225, 2147483647
      %v227 = vand.u32 %v226, 65535
      %v228 = vshra.s32 %v226, 16
      %v229 = vcvt.s32.f32 %v227
      %v230 = vcvt.s32.f32 %v228
      %231 = vmin.xlane.f32.xlu0 %v230
      %v232 = vpop.xlane.xlu0 %231
      %vm233 = vcmp.eq.f32.partialorder %v230, %v232
      %v234 = vsel %vm233, %v229, inf
      %235 = vmin.xlane.f32.xlu0 %v234
      %v236 = vpop.xlane.xlu0 %235
      %v237 = vcvt.f32.s32 %v236
      %v238 = vcvt.f32.s32 %v232
      %v239 = vshll.u32 %v238, 16
      %v240 = vadd.s32 %v239, %v237
      %vm241 = vcmp.eq.s32.totalorder %v219, 0
      %v242 = vsel %vm241, %v240, 0
      %vm243 = vcmask 1048064
      %v244 = vsel %vm243, %v215, -inf
      %245 = vmax.xlane.f32.xlu0 %v244
      %v246 = vpop.xlane.xlu0 %245
      %vm247 = vcmp.eq.f32.partialorder %v215, %v246
      %248 = vrot.lane.b32.xlu0 %v219, 64
      %v249 = vpop.permute.xlu0 %248
      %v250 = vsel %vm247, %v249, 63
      %v251 = vsel %vm243, %v250, 2147483647
      %v252 = vand.u32 %v251, 65535
      %v253 = vshra.s32 %v251, 16
      %v254 = vcvt.s32.f32 %v252
      %v255 = vcvt.s32.f32 %v253
      %256 = vmin.xlane.f32.xlu0 %v255
      %v257 = vpop.xlane.xlu0 %256
      %vm258 = vcmp.eq.f32.partialorder %v255, %v257
      %v259 = vsel %vm258, %v254, inf
      %260 = vmin.xlane.f32.xlu0 %v259
      %v261 = vpop.xlane.xlu0 %260
      %v262 = vcvt.f32.s32 %v261
      %v263 = vcvt.f32.s32 %v257
      %v264 = vshll.u32 %v263, 16
      %v265 = vadd.s32 %v264, %v262
      %vm266 = vcmp.eq.s32.totalorder %v219, 1
      %v267 = vsel %vm266, %v265, %v242
      %vm268 = vcmask 15360
      %269 = vst.msk [vmem:[%s138] sm:$0xff] %vm268, %v267
      %p270 = scmp.lt.s32.totalorder %s13, 2
      %s271 = scalar_select %p270, %s13, 2
      %s272 = smul.addr %s271, 8
      %s273 = scalar_lea.vmem %s2, %s272
      // Predicated region
      $region29: #{random_projection_quantize.1} parent=27 // pred_check
        %p274 = pneg %p78
      $region30: #{random_projection_quantize.1} parent=27 // pred_check_branch
        %276 = sbr.rel (%p274) target = $region32
      $region31: #{random_projection_quantize.1} parent=27 // pred_region
        _
      $region32: #{random_projection_quantize.1} parent=27 // pred_fallthru
        _
    $region28: #{random_projection_quantize.1} parent=5 // pred_fallthru
      _
    %p277 = scmp.le.s32.totalorder 2, %s8
    // Predicated region
    $region33: #{random_projection_quantize.1} parent=5 // pred_check
      %p278 = pneg %p277
    $region34: #{random_projection_quantize.1} parent=5 // pred_check_branch
      %280 = sbr.rel (%p278) target = $region36
    $region35: #{random_projection_quantize.1} parent=5 // pred_region
      %s281 = ssub.s32 %s8, 2
      // Predicated region
      $region37: #{random_projection_quantize.1} parent=35 // pred_check
        %p282 = pneg %p84
      $region38: #{random_projection_quantize.1} parent=35 // pred_check_branch
        %284 = sbr.rel (%p282) target = $region40
      $region39: #{random_projection_quantize.1} parent=35 // pred_region
        %p285 = scmp.lt.s32.totalorder %s14, 2
        %s286 = scalar_select %p285, %s14, 2
        %s287 = smul.addr %s286, 8
        %s288 = scalar_lea.vmem %s2, %s287
      $region40: #{random_projection_quantize.1} parent=35 // pred_fallthru
        _
    $region36: #{random_projection_quantize.1} parent=5 // pred_fallthru
      _
  $region6: #{random_projection_quantize.1} parent=0 // loop_footer
    %s12 = sadd.s32 1, %s8
  $region7: #{random_projection_quantize.1} parent=0 // loop_footer_branch
    %7 = sbr.rel target = $region3
  $region8: #{random_projection_quantize.1} parent=0 // loop_exit
    _

</llo_original>
